<compile_context>
chip_gen: v7x
topology: tpu7x:2x2x1
jax: 0.10.0
libtpu: 0.0.40
codegen_flags: <defaults>
</compile_context>

<pallas_src>
import math

import jax
import jax.numpy as jnp
from jax.experimental import pallas as pl
from jax.experimental.pallas import tpu as pltpu


def _cls_token_emb_kernel(w_ref, emb_ref, out_emb_ref):
    """One (batch row, H tile): CLS row + shifted copy of the embedding.

    Block shapes:
      w_ref       : (1, tH)
      emb_ref     : (1, S, tH)
      out_emb_ref : (1, S + 1, tH)
    """
    # CLS row (sequence position 0 of this output block).
    out_emb_ref[:, 0:1, :] = w_ref[...][:, None, :]
    # Body rows 1..S: in-VMEM copy. The HBM write-back DMA of this whole block is a
    # fully aligned, lane-dense blocked copy; only the in-VMEM store carries the +1
    # sublane offset (kernel is DMA-bound, so this is off the critical path).
    out_emb_ref[:, 1:, :] = emb_ref[...]


def _cls_mask_kernel(mask_ref, out_mask_ref):
    """Tiny mask concat, kept out of the hot copy kernel."""
    b = mask_ref.shape[0]
    out_mask_ref[:, 0:1] = jnp.ones((b, 1), dtype=out_mask_ref.dtype)
    out_mask_ref[:, 1:] = mask_ref[...]


def _pick_h_tile(seq_len, hidden, itemsize, budget_bytes=6 * 1024 * 1024):
    """Largest lane-dense (multiple-of-128) H tile whose in+out blocks fit the budget.

    budget_bytes is for a single (input block + output block); with double-buffering
    the pipeline uses roughly 2x that, which still fits the smallest scoped VMEM
    budget across v5e / v6e / v7x.
    """
    if hidden % 128 != 0:
        # Last-dim blocks must be a multiple of 128 or the full dim.
        return hidden

    def block_bytes(th):
        return (seq_len + (seq_len + 1)) * th * itemsize

    for th in range(hidden, 0, -128):  # multiples of 128 (hidden % 128 == 0)
        if hidden % th == 0 and block_bytes(th) <= budget_bytes:
            return th
    return 128


def cls_token_forward(weight, embedding, attention_mask=None):
    """JAX wrapper mirroring CLSToken.forward.

    weight:         [H]      learnable CLS token
    embedding:      [B, S, H]
    attention_mask: [B, S] or None
    returns dict with 'embedding' [B, S+1, H] and 'attention_mask' ([B, S+1] or None)
    """
    B, S, H = embedding.shape
    w2d = weight.reshape(1, H).astype(embedding.dtype)

    itemsize = jnp.dtype(embedding.dtype).itemsize
    tH = _pick_h_tile(S, H, itemsize)
    n_h = pl.cdiv(H, tH)

    out_emb = pl.pallas_call(
        _cls_token_emb_kernel,
        out_shape=jax.ShapeDtypeStruct((B, S + 1, H), embedding.dtype),
        grid=(B, n_h),
        in_specs=[
            # CLS weight: batch-invariant index_map -> stays resident / tiny re-DMA.
            pl.BlockSpec((1, tH), lambda b, h: (0, h)),
            # Embedding: one batch row x one lane-dense H tile per grid step.
            pl.BlockSpec((1, S, tH), lambda b, h: (b, 0, h)),
        ],
        out_specs=pl.BlockSpec((1, S + 1, tH), lambda b, h: (b, 0, h)),
        compiler_params=pltpu.CompilerParams(
            dimension_semantics=("parallel", "parallel"),
            vmem_limit_bytes=32 * 1024 * 1024,
        ),
    )(w2d, embedding)

    out_mask = None
    if attention_mask is not None:
        vmem = pl.BlockSpec(memory_space=pltpu.MemorySpace.VMEM)
        out_mask = pl.pallas_call(
            _cls_mask_kernel,
            out_shape=jax.ShapeDtypeStruct((B, S + 1), attention_mask.dtype),
            in_specs=[vmem],
            out_specs=vmem,
        )(attention_mask)

    return {"embedding": out_emb, "attention_mask": out_mask}


if __name__ == "__main__":
    # Small shapes consistent with the module's forward.
    B, S, H = 2, 8, 32

    key = jax.random.PRNGKey(0)
    k_w, k_emb = jax.random.split(key)

    # Deterministic init matching nn_init.uniform_(-1/sqrt(H), 1/sqrt(H)).
    bound = 1.0 / math.sqrt(H)
    weight = jax.random.uniform(k_w, (H,), minval=-bound, maxval=bound, dtype=jnp.float32)

    embedding = jax.random.normal(k_emb, (B, S, H), dtype=jnp.float32)
    attention_mask = jnp.ones((B, S), dtype=jnp.float32)

    out = cls_token_forward(weight, embedding, attention_mask)
    jax.block_until_ready(out["embedding"])
    jax.block_until_ready(out["attention_mask"])

    # Reference check in plain JAX.
    ref_emb = jnp.concatenate(
        [jnp.broadcast_to(weight[None, None, :], (B, 1, H)), embedding], axis=1
    )
    ref_mask = jnp.concatenate(
        [jnp.ones((B, 1), attention_mask.dtype), attention_mask], axis=1
    )

    assert out["embedding"].shape == (B, S + 1, H)
    assert out["attention_mask"].shape == (B, S + 1)
    assert jnp.allclose(out["embedding"], ref_emb)
    assert jnp.allclose(out["attention_mask"], ref_mask)

    # Also exercise the mask-free path.
    out_nomask = cls_token_forward(weight, embedding, None)
    jax.block_until_ready(out_nomask["embedding"])
    assert out_nomask["attention_mask"] is None
    assert jnp.allclose(out_nomask["embedding"], ref_emb)

    print("KERNEL_OK")
</pallas_src>

<mosaic_0001>
module attributes {stable_mosaic.version = 11 : i64} {
  func.func @_cls_token_emb_kernel(%arg0: i32, %arg1: i32, %arg2: memref<1x32xf32, #tpu.memory_space<vmem>>, %arg3: memref<1x8x32xf32, #tpu.memory_space<vmem>>, %arg4: memref<1x9x32xf32, #tpu.memory_space<vmem>>) attributes {dimension_semantics = [#tpu.dimension_semantics<parallel>, #tpu.dimension_semantics<parallel>], iteration_bounds = array<i64: 2, 1>, scalar_prefetch = 0 : i64, scratch_operands = 0 : i64, tpu.core_type = #tpu.core_type<tc>, window_params = [{transform_indices = @transform_0, window_bounds = array<i64: 1, 32>}, {transform_indices = @transform_1, window_bounds = array<i64: 1, 8, 32>}, {transform_indices = @transform_2, window_bounds = array<i64: 1, 9, 32>}]} {
    %c0 = arith.constant 0 : index
    %c0_0 = arith.constant 0 : index
    %0 = vector.load %arg2[%c0, %c0_0] : memref<1x32xf32, #tpu.memory_space<vmem>>, vector<1x32xf32>
    %1 = vector.shape_cast %0 : vector<1x32xf32> to vector<1x1x32xf32>
    %c0_1 = arith.constant 0 : index
    %c0_2 = arith.constant 0 : index
    %c0_3 = arith.constant 0 : index
    %2 = vector.load %arg4[%c0_1, %c0_2, %c0_3] : memref<1x9x32xf32, #tpu.memory_space<vmem>>, vector<1x1x32xf32>
    tpu.vector_store %arg4[%c0_1, %c0_2, %c0_3], %1 {strides = array<i32>} : memref<1x9x32xf32, #tpu.memory_space<vmem>>, vector<1x1x32xf32>,
    %c0_4 = arith.constant 0 : index
    %c0_5 = arith.constant 0 : index
    %c0_6 = arith.constant 0 : index
    %3 = vector.load %arg3[%c0_4, %c0_5, %c0_6] : memref<1x8x32xf32, #tpu.memory_space<vmem>>, vector<1x8x32xf32>
    %c0_7 = arith.constant 0 : index
    %c1 = arith.constant 1 : index
    %c0_8 = arith.constant 0 : index
    %4 = vector.load %arg4[%c0_7, %c1, %c0_8] : memref<1x9x32xf32, #tpu.memory_space<vmem>>, vector<1x8x32xf32>
    tpu.vector_store %arg4[%c0_7, %c1, %c0_8], %3 {strides = array<i32>} : memref<1x9x32xf32, #tpu.memory_space<vmem>>, vector<1x8x32xf32>,
    return
  }
  func.func @transform_0(%arg0: i32, %arg1: i32) -> (i32, i32) {
    %c0_i32 = arith.constant 0 : i32
    %c0_i32_0 = arith.constant 0 : i32
    return %c0_i32, %arg1 : i32, i32
  }
  func.func @transform_1(%arg0: i32, %arg1: i32) -> (i32, i32, i32) {
    %c0_i32 = arith.constant 0 : i32
    %c0_i32_0 = arith.constant 0 : i32
    return %arg0, %c0_i32, %arg1 : i32, i32, i32
  }
  func.func @transform_2(%arg0: i32, %arg1: i32) -> (i32, i32, i32) {
    %c0_i32 = arith.constant 0 : i32
    %c0_i32_0 = arith.constant 0 : i32
    return %arg0, %c0_i32, %arg1 : i32, i32, i32
  }
}

</mosaic_0001>

<llo_original>
// kernel: tpu_custom_call.1
$region0: #{tpu_custom_call.1}
  #allocation0 [shape = 'u32[]', space=smem, size = 0x4, offset = 0x4, fixed_abs, tag = 'smem constant byte address 0x4 - core index']
  #allocation1 [shape = 'u32[144,128]{1,0:T(1,128)}', space=vmem, size = 0x12000, scoped, tag = 'internal scratch']
  %s0 = inlined_call_operand.hbm [shape: f32[1,32], index: 0, kind: input, shape index: {}]
  %s1 = inlined_call_operand.hbm [shape: f32[2,8,32], index: 1, kind: input, shape index: {}]
  %s2 = inlined_call_operand.vmem [shape: f32[2,9,32], index: 2, kind: output, shape index: {}]
  %s3 = sld [smem:[#allocation0]]
  $region49: #{tpu_custom_call.1} parent=0
    _
  %s5 = ssub.s32 1, %s3
  %s6 = scalar_select 0, %s5, %s3
  $region1: #{tpu_custom_call.1} parent=0
    #allocation2 [shape = 'u8[512]{0}', space=vmem, size = 0x400, scoped, tag = 'input window, operand 0, single buffered']
    #allocation3 [shape = 's32[2]{0}', space=sflag, size = 0x8, scoped, tag = 'scoped memory for tpu_custom_call.1']
    #allocation4 [shape = 'u8[8192]{0}', space=vmem, size = 0x2000, scoped, tag = 'input window, operand 1']
    #allocation5 [shape = 's32[2]{0}', space=sflag, size = 0x8, scoped, tag = 'scoped memory for tpu_custom_call.1']
    %7 = vsyncpa [#allocation3], 0
    %8 = vsyncpa [#allocation5], 0
    %s9 = scalar_lea.sflag [#allocation5], 1
    %10 = vsyncpa %s9, 0
    loop: start=0, step=1, limit=4
    $region2: #{tpu_custom_call.1} parent=1 // loop_pre_header
      _
    $region3: #{tpu_custom_call.1} parent=1 // loop_header
      %s12 = sphi 0, %s16
      %p13 = scmp.ge.s32.totalorder %s12, 4
      %s19 = sphi 0, %s31
      %s20 = sphi 0, %s27
      %s21 = sphi 0, %s19
      %s22 = sphi 0, %s20
      %s23 = sphi 0, %s21
      %s24 = sphi 0, %s22
      %s34 = sphi 0, %s36
      %s37 = sphi 0, %s34
      %s38 = sphi 0, %s37
      %s54 = sphi 0, %s38
      %s62 = sphi 0, %s64
      %s65 = sphi 0, %s62
      %s66 = sphi 0, %s65
      %s82 = sphi 0, %s66
      %s90 = sphi 0, %s92
      %s93 = sphi 0, %s90
      %s94 = sphi 0, %s93
      %s110 = sphi 0, %s94
    $region4: #{tpu_custom_call.1} parent=1 // loop_header_branch
      %15 = sbr.rel (%p13) target = $region8
    $region5: #{tpu_custom_call.1} parent=1 // loop_body
      %s17 = ssub.s32 %s12, 1
      %s18 = ssub.s32 %s12, 2
      %s25 = sadd.s32 1, %s20
      %p26 = scmp.ge.s32.totalorder %s25, 1
      %s27 = scalar_select %p26, 0, %s25
      %s28 = sadd.s32 1, %s19
      %s29 = scalar_select %p26, %s28, %s19
      %p30 = scmp.ge.s32.totalorder %s29, 2
      %s31 = scalar_select %p30, 0, %s29
      %s32 = ssub.s32 %s20, %s27
      %p33 = scmp.eq.s32.totalorder %s32, 0
      %s35 = sadd.s32 %s34, 1
      %s36 = scalar_select %p33, %s34, %s35
      %p39 = pneg %p33
      %p40 = scmp.eq.s32.totalorder %s12, 1
      %p41 = por %p39, %p40
      %p42 = scmp.ne.s32.totalorder %s34, %s37
      %p43 = scmp.eq.s32.totalorder %s12, 0
      %p44 = por %p42, %p43
      %p45 = scmp.ne.s32.totalorder %s34, %s37
      %p46 = scmp.eq.s32.totalorder %s17, 1
      %p47 = por %p45, %p46
      %p48 = scmp.ne.s32.totalorder %s37, %s38
      %p49 = scmp.eq.s32.totalorder %s17, 0
      %p50 = por %p48, %p49
      %p51 = scmp.ne.s32.totalorder %s37, %s38
      %p52 = scmp.eq.s32.totalorder %s18, 1
      %p53 = por %p51, %p52
      %p55 = scmp.ne.s32.totalorder %s38, %s54
      %p56 = scmp.eq.s32.totalorder %s18, 0
      %p57 = por %p55, %p56
      %s58 = ssub.s32 %s19, %s31
      %s59 = ssub.s32 %s20, %s27
      %s60 = sor.u32 %s58, %s59
      %p61 = scmp.eq.s32.totalorder %s60, 0
      %s63 = sadd.s32 %s62, 1
      %s64 = scalar_select %p61, %s62, %s63
      %p67 = pneg %p61
      %p68 = scmp.eq.s32.totalorder %s12, 1
      %p69 = por %p67, %p68
      %p70 = scmp.ne.s32.totalorder %s62, %s65
      %p71 = scmp.eq.s32.totalorder %s12, 0
      %p72 = por %p70, %p71
      %p73 = scmp.ne.s32.totalorder %s62, %s65
      %p74 = scmp.eq.s32.totalorder %s17, 1
      %p75 = por %p73, %p74
      %p76 = scmp.ne.s32.totalorder %s65, %s66
      %p77 = scmp.eq.s32.totalorder %s17, 0
      %p78 = por %p76, %p77
      %p79 = scmp.ne.s32.totalorder %s65, %s66
      %p80 = scmp.eq.s32.totalorder %s18, 1
      %p81 = por %p79, %p80
      %p83 = scmp.ne.s32.totalorder %s66, %s82
      %p84 = scmp.eq.s32.totalorder %s18, 0
      %p85 = por %p83, %p84
      %s86 = ssub.s32 %s19, %s31
      %s87 = ssub.s32 %s20, %s27
      %s88 = sor.u32 %s86, %s87
      %p89 = scmp.eq.s32.totalorder %s88, 0
      %s91 = sadd.s32 %s90, 1
      %s92 = scalar_select %p89, %s90, %s91
      %p95 = pneg %p89
      %p96 = scmp.eq.s32.totalorder %s12, 1
      %p97 = por %p95, %p96
      %p98 = scmp.ne.s32.totalorder %s90, %s93
      %p99 = scmp.eq.s32.totalorder %s12, 0
      %p100 = por %p98, %p99
      %p101 = scmp.ne.s32.totalorder %s90, %s93
      %p102 = scmp.eq.s32.totalorder %s17, 1
      %p103 = por %p101, %p102
      %p104 = scmp.ne.s32.totalorder %s93, %s94
      %p105 = scmp.eq.s32.totalorder %s17, 0
      %p106 = por %p104, %p105
      %p107 = scmp.ne.s32.totalorder %s93, %s94
      %p108 = scmp.eq.s32.totalorder %s18, 1
      %p109 = por %p107, %p108
      %p111 = scmp.ne.s32.totalorder %s94, %s110
      %p112 = scmp.eq.s32.totalorder %s18, 0
      %p113 = por %p111, %p112
      %p114 = scmp.le.s32.totalorder 1, %s12
      %p115 = scmp.lt.s32.totalorder %s12, 3
      %p116 = pnand %p114, %p115
      %p117 = pneg %p116
      // Predicated region
      $region9: #{tpu_custom_call.1} parent=5 // pred_check
        _
      $region10: #{tpu_custom_call.1} parent=5 // pred_check_branch
        %119 = sbr.rel (%p116) target = $region12
      $region11: #{tpu_custom_call.1} parent=5 // pred_region
        %s120 = ssub.s32 %s12, 1
        // Predicated region
        $region13: #{tpu_custom_call.1} parent=11 // pred_check
          %p121 = pneg %p50
        $region14: #{tpu_custom_call.1} parent=11 // pred_check_branch
          %123 = sbr.rel (%p121) target = $region16
        $region15: #{tpu_custom_call.1} parent=11 // pred_region
          %s125 = ssub.s32 16, 16
          %126 = vsyncadd [#allocation3], %s125
          %s127 = smul.addr %s22, 16
          %s128 = scalar_lea.hbm %s0, %s127
          %s130 = sshll.u32 [#allocation2], 4
          %s131 = int_to_ptr.vmem [resolvable:$true] %s130
          %133 = dma.hbm_to_vmem [thread:$0]  %s128, 16, %s131, [#allocation3]
        $region16: #{tpu_custom_call.1} parent=11 // pred_fallthru
          _
      $region12: #{tpu_custom_call.1} parent=5 // pred_fallthru
        _
      %p134 = scmp.lt.s32.totalorder %s12, 2
      // Predicated region
      $region17: #{tpu_custom_call.1} parent=5 // pred_check
        %p135 = pneg %p134
      $region18: #{tpu_custom_call.1} parent=5 // pred_check_branch
        %137 = sbr.rel (%p135) target = $region20
      $region19: #{tpu_custom_call.1} parent=5 // pred_region
        // Predicated region
        $region21: #{tpu_custom_call.1} parent=19 // pred_check
          %p138 = pneg %p72
        $region22: #{tpu_custom_call.1} parent=19 // pred_check_branch
          %140 = sbr.rel (%p138) target = $region24
        $region23: #{tpu_custom_call.1} parent=19 // pred_region
          %s141 = sand.u32 %s62, 1
          %s142 = scalar_lea.sflag [#allocation5], %s141
          %s143 = sand.u32 %s62, 1
          %s144 = smul.addr %s143, 8
          %s145 = scalar_lea.vmem [#allocation4], %s144
          %s147 = ssub.s32 128, 128
          %148 = vsyncadd %s142, %s147
          %s149 = sadd.s32 %s20, %s19
          %s150 = smul.addr %s149, 128
          %s151 = scalar_lea.hbm %s1, %s150
          %s153 = sshll.u32 %s145, 4
          %s154 = int_to_ptr.vmem [resolvable:$true] %s153
          %156 = dma.hbm_to_vmem [thread:$0]  %s151, 128, %s154, %s142
        $region24: #{tpu_custom_call.1} parent=19 // pred_fallthru
          _
      $region20: #{tpu_custom_call.1} parent=5 // pred_fallthru
        _
      %p157 = scmp.le.s32.totalorder 1, %s12
      %p158 = scmp.lt.s32.totalorder %s12, 3
      %p159 = pnand %p157, %p158
      %p160 = pneg %p159
      // Predicated region
      $region25: #{tpu_custom_call.1} parent=5 // pred_check
        _
      $region26: #{tpu_custom_call.1} parent=5 // pred_check_branch
        %162 = sbr.rel (%p159) target = $region28
      $region27: #{tpu_custom_call.1} parent=5 // pred_region
        %s163 = ssub.s32 %s12, 1
        // Predicated region
        $region29: #{tpu_custom_call.1} parent=27 // pred_check
          %p164 = pneg %p50
        $region30: #{tpu_custom_call.1} parent=27 // pred_check_branch
          %166 = sbr.rel (%p164) target = $region32
        $region31: #{tpu_custom_call.1} parent=27 // pred_region
          %167 = dma.done [#allocation3], 16
        $region32: #{tpu_custom_call.1} parent=27 // pred_fallthru
          _
        %s168 = sand.u32 %s65, 1
        %s169 = scalar_lea.sflag [#allocation5], %s168
        %s170 = sand.u32 %s65, 1
        %s171 = smul.addr %s170, 8
        %s172 = scalar_lea.vmem [#allocation4], %s171
        // Predicated region
        $region33: #{tpu_custom_call.1} parent=27 // pred_check
          %p173 = pneg %p78
        $region34: #{tpu_custom_call.1} parent=27 // pred_check_branch
          %175 = sbr.rel (%p173) target = $region36
        $region35: #{tpu_custom_call.1} parent=27 // pred_region
          %176 = dma.done %s169, 128
        $region36: #{tpu_custom_call.1} parent=27 // pred_fallthru
          _
        %p177 = pneg %p50
        %p178 = pneg %p47
        %s179 = sand.u32 %s65, 1
        %s180 = scalar_lea.sflag [#allocation5], %s179
        %s181 = sand.u32 %s65, 1
        %s182 = smul.addr %s181, 8
        %s183 = scalar_lea.vmem [#allocation4], %s182
        %p184 = pneg %p78
        %p185 = pneg %p75
        %p186 = pneg %p106
        %p187 = pneg %p103
        %p188 = scmp.lt.s32.totalorder %s21, 1
        %s189 = scalar_select %p188, %s21, 1
        %p190 = scmp.lt.s32.totalorder %s22, 0
        %s191 = scalar_select %p190, %s22, 0
        %s192 = smul.addr %s189, 2
        %s193 = sadd.s32 %s191, %s192
        %s194 = smul.addr %s193, 8
        %s195 = scalar_lea.vmem %s2, %s194
        %p196 = scmp.lt.s32.totalorder %s21, 1
        %s197 = scalar_select %p196, %s21, 1
        %p198 = scmp.lt.s32.totalorder %s22, 0
        %s199 = scalar_select %p198, %s22, 0
        %s200 = smul.addr %s197, 2
        %s201 = sadd.s32 %s199, %s200
        %s202 = smul.addr %s201, 8
        %s203 = scalar_lea.vmem %s2, %s202
        %v204 = vld [vmem:[#allocation2] sm:$0x1]
        %vm205 = vcmask 253952
        %206 = vst.msk [vmem:[%s203] sm:$0x1] %vm205, %v204
        %v207 = vld [vmem:[%s172] sm:$0xff]
        %vm208 = vcmask 261120
        %209 = vst.msk [vmem:[%s203 + $0x1] sm:$0xff] %vm208, %v207
        %p210 = scmp.lt.s32.totalorder %s21, 1
        %s211 = scalar_select %p210, %s21, 1
        %p212 = scmp.lt.s32.totalorder %s22, 0
        %s213 = scalar_select %p212, %s22, 0
        %s214 = smul.addr %s211, 2
        %s215 = sadd.s32 %s213, %s214
        %s216 = smul.addr %s215, 8
        %s217 = scalar_lea.vmem %s2, %s216
        // Predicated region
        $region37: #{tpu_custom_call.1} parent=27 // pred_check
          %p218 = pneg %p103
        $region38: #{tpu_custom_call.1} parent=27 // pred_check_branch
          %220 = sbr.rel (%p218) target = $region40
        $region39: #{tpu_custom_call.1} parent=27 // pred_region
          _
        $region40: #{tpu_custom_call.1} parent=27 // pred_fallthru
          _
      $region28: #{tpu_custom_call.1} parent=5 // pred_fallthru
        _
      %p221 = scmp.le.s32.totalorder 2, %s12
      // Predicated region
      $region41: #{tpu_custom_call.1} parent=5 // pred_check
        %p222 = pneg %p221
      $region42: #{tpu_custom_call.1} parent=5 // pred_check_branch
        %224 = sbr.rel (%p222) target = $region44
      $region43: #{tpu_custom_call.1} parent=5 // pred_region
        %s225 = ssub.s32 %s12, 2
        // Predicated region
        $region45: #{tpu_custom_call.1} parent=43 // pred_check
          %p226 = pneg %p109
        $region46: #{tpu_custom_call.1} parent=43 // pred_check_branch
          %228 = sbr.rel (%p226) target = $region48
        $region47: #{tpu_custom_call.1} parent=43 // pred_region
          %p229 = scmp.lt.s32.totalorder %s23, 1
          %s230 = scalar_select %p229, %s23, 1
          %p231 = scmp.lt.s32.totalorder %s24, 0
          %s232 = scalar_select %p231, %s24, 0
          %s233 = smul.addr %s230, 2
          %s234 = sadd.s32 %s232, %s233
          %s235 = smul.addr %s234, 8
          %s236 = scalar_lea.vmem %s2, %s235
        $region48: #{tpu_custom_call.1} parent=43 // pred_fallthru
          _
      $region44: #{tpu_custom_call.1} parent=5 // pred_fallthru
        _
    $region6: #{tpu_custom_call.1} parent=1 // loop_footer
      %s16 = sadd.s32 1, %s12
    $region7: #{tpu_custom_call.1} parent=1 // loop_footer_branch
      %11 = sbr.rel target = $region3
    $region8: #{tpu_custom_call.1} parent=1 // loop_exit
      _
    %237 = vsyncpa [#allocation3], 1
    %s238 = scalar_lea.sflag [#allocation3], 1
    %239 = vsyncpa %s238, 1
    %240 = vsyncpa [#allocation5], 1
    %s241 = scalar_lea.sflag [#allocation5], 1
    %242 = vsyncpa %s241, 1

</llo_original>
